<compile_context>
chip_gen: v7x
topology: tpu7x:2x2x1
jax: 0.10.0
libtpu: 0.0.40
codegen_flags: <defaults>
</compile_context>

<pallas_src>
import functools

import jax
import jax.numpy as jnp
from jax.experimental import pallas as pl
from jax.experimental.pallas import tpu as pltpu

SRC_F = 2                    # src / dest per-node feature dim
U_F = 32                     # global (u) feature dim
IN_F = 2 * SRC_F + U_F       # 36, first Linear input width
HID = 32                     # hidden width of edge_mlp
OUT_F = 32                   # output width of edge_mlp
DEFAULT_BLOCK_ROWS = 4096    # edge rows per grid step (multiple of 8)
VMEM_LIMIT_BYTES = 48 * 1024 * 1024


def _round_up(x, m):
    return (x + m - 1) // m * m


def edge_decoder_kernel(sd_ref, bidx_ref, w1ab_ref, uc_ref, w2_ref, b2_ref,
                        out_ref):
    tm = sd_ref.shape[0]
    nb = uc_ref.shape[0]
    # Layer 1 (split-weight, gather-fused form of cat([src, dest, u[batch]]) @ W1 + b1):
    #   [src|dest] @ W1[:4]  +  one_hot(batch) @ (u @ W1[4:] + b1)
    h = jnp.dot(sd_ref[...], w1ab_ref[...], preferred_element_type=jnp.float32)
    one_hot = (bidx_ref[...] ==
               jax.lax.broadcasted_iota(jnp.int32, (tm, nb), 1)
               ).astype(jnp.float32)
    h += jnp.dot(one_hot, uc_ref[...], preferred_element_type=jnp.float32)
    h = jnp.maximum(h, 0.0)                                   # ReLU (VPU)
    # Layer 2: Linear(32, 32).
    y = jnp.dot(h, w2_ref[...], preferred_element_type=jnp.float32)
    out_ref[...] = (y + b2_ref[...]).astype(out_ref.dtype)


@functools.partial(jax.jit, static_argnames=("block_rows",))
def edge_decoder(src, dest, edge_attr, u, batch, w1, b1, w2, b2,
                 *, block_rows=DEFAULT_BLOCK_ROWS):
    """Forward pass of EdgeDecoder. edge_attr is accepted but unused (as in torch)."""
    del edge_attr  # unused by the PyTorch forward pass
    E = src.shape[0]
    B = u.shape[0]
    if E == 0:
        return jnp.zeros((0, OUT_F), jnp.float32)

    # Merge the two 2-wide streams into one [E, 4] stream (one DMA, one matmul).
    sd = jnp.concatenate([src, dest], axis=1).astype(jnp.float32)   # [E, 4]
    # Index column for the in-kernel one-hot gather of the u contribution.
    bidx = batch.astype(jnp.int32).reshape(E, 1)                    # [E, 1]

    # Split W1 along its input axis; fold b1 into the (tiny) precomputed u-term.
    w1ab = w1[:2 * SRC_F].astype(jnp.float32)                       # [4, 32]
    uc = (u.astype(jnp.float32) @ w1[2 * SRC_F:].astype(jnp.float32)
          + b1.reshape(1, HID).astype(jnp.float32))                 # [B, 32]
    b2r = b2.reshape(1, OUT_F).astype(jnp.float32)

    # Row tile: large to amortise per-step overhead, sublane-aligned, and
    # capped so large E yields grid >= 2 (v7x megacore sharding).
    tm = min(block_rows, _round_up(max(-(-E // 2), 1), 8))
    grid = (pl.cdiv(E, tm),)

    out = pl.pallas_call(
        edge_decoder_kernel,
        out_shape=jax.ShapeDtypeStruct((E, OUT_F), jnp.float32),
        grid_spec=pltpu.PrefetchScalarGridSpec(
            num_scalar_prefetch=0,
            grid=grid,
            in_specs=[
                pl.BlockSpec((tm, 2 * SRC_F), lambda i: (i, 0)),  # [src|dest] tile
                pl.BlockSpec((tm, 1), lambda i: (i, 0)),          # batch index tile
                pl.BlockSpec((2 * SRC_F, HID), lambda i: (0, 0)),  # w1ab (resident)
                pl.BlockSpec((B, HID), lambda i: (0, 0)),          # uc   (resident)
                pl.BlockSpec((HID, OUT_F), lambda i: (0, 0)),      # w2   (resident)
                pl.BlockSpec((1, OUT_F), lambda i: (0, 0)),        # b2   (resident)
            ],
            out_specs=pl.BlockSpec((tm, OUT_F), lambda i: (i, 0)),
        ),
        compiler_params=pltpu.CompilerParams(
            dimension_semantics=("parallel",),
            vmem_limit_bytes=VMEM_LIMIT_BYTES),
    )(sd, bidx, w1ab, uc, w2.astype(jnp.float32), b2r)

    return out


def edge_decoder_ref(src, dest, edge_attr, u, batch, w1, b1, w2, b2):
    del edge_attr
    x = jnp.concatenate([src, dest, u[batch]], axis=1)
    h = jnp.maximum(x @ w1 + b1.reshape(1, -1), 0.0)
    return h @ w2 + b2.reshape(1, -1)


if __name__ == "__main__":
    key = jax.random.PRNGKey(0)
    k_src, k_dst, k_ea, k_u, k_b, k_w1, k_b1, k_w2, k_b2 = jax.random.split(key, 9)

    E = 20   # number of edges (deliberately NOT a multiple of the tile)
    B = 2    # number of graphs in the batch

    src = jax.random.normal(k_src, (E, SRC_F), dtype=jnp.float32)
    dest = jax.random.normal(k_dst, (E, SRC_F), dtype=jnp.float32)
    edge_attr = jax.random.normal(k_ea, (E, 4), dtype=jnp.float32)  # unused
    u = jax.random.normal(k_u, (B, U_F), dtype=jnp.float32)
    batch = jax.random.randint(k_b, (E,), 0, B, dtype=jnp.int32)

    # Deterministic parameter init (PyTorch-Linear-like uniform bounds),
    # stored as [in, out] so forward is x @ W + b.
    lim1 = 1.0 / jnp.sqrt(float(IN_F))
    lim2 = 1.0 / jnp.sqrt(float(HID))
    w1 = jax.random.uniform(k_w1, (IN_F, HID), jnp.float32, -lim1, lim1)
    b1 = jax.random.uniform(k_b1, (HID,), jnp.float32, -lim1, lim1)
    w2 = jax.random.uniform(k_w2, (HID, OUT_F), jnp.float32, -lim2, lim2)
    b2 = jax.random.uniform(k_b2, (OUT_F,), jnp.float32, -lim2, lim2)

    ref = edge_decoder_ref(src, dest, edge_attr, u, batch, w1, b1, w2, b2)

    # 1) default configuration: tm=16, grid=2, last block partial (20 = 16 + 4).
    out = edge_decoder(src, dest, edge_attr, u, batch, w1, b1, w2, b2)
    out = jax.block_until_ready(out)
    assert out.shape == (E, OUT_F), out.shape
    assert jnp.allclose(out, ref, atol=1e-5, rtol=1e-5), "mismatch (default tile)"

    # 2) small tile to exercise the multi-block grid + partial-last-block path
    #    (tm=8, grid=3, 20 = 8 + 8 + 4).
    out_small = edge_decoder(src, dest, edge_attr, u, batch, w1, b1, w2, b2,
                             block_rows=8)
    out_small = jax.block_until_ready(out_small)
    assert jnp.allclose(out_small, ref, atol=1e-5, rtol=1e-5), "mismatch (tile=8)"

    print("KERNEL_OK")
</pallas_src>

<mosaic_0001>
module attributes {stable_mosaic.version = 11 : i64} {
  func.func @edge_decoder_kernel(%arg0: i32, %arg1: memref<16x4xf32, #tpu.memory_space<vmem>>, %arg2: memref<16x1xi32, #tpu.memory_space<vmem>>, %arg3: memref<4x32xf32, #tpu.memory_space<vmem>>, %arg4: memref<2x32xf32, #tpu.memory_space<vmem>>, %arg5: memref<32x32xf32, #tpu.memory_space<vmem>>, %arg6: memref<1x32xf32, #tpu.memory_space<vmem>>, %arg7: memref<16x32xf32, #tpu.memory_space<vmem>>) attributes {dimension_semantics = [#tpu.dimension_semantics<parallel>], iteration_bounds = array<i64: 2>, scalar_prefetch = 0 : i64, scratch_operands = 0 : i64, tpu.core_type = #tpu.core_type<tc>, window_params = [{transform_indices = @transform_0, window_bounds = array<i64: 16, 4>}, {transform_indices = @transform_1, window_bounds = array<i64: 16, 1>}, {pipeline_mode = #tpu.pipeline_mode<synchronous>, transform_indices = @transform_2, window_bounds = array<i64: 4, 32>}, {pipeline_mode = #tpu.pipeline_mode<synchronous>, transform_indices = @transform_3, window_bounds = array<i64: 2, 32>}, {pipeline_mode = #tpu.pipeline_mode<synchronous>, transform_indices = @transform_4, window_bounds = array<i64: 32, 32>}, {pipeline_mode = #tpu.pipeline_mode<synchronous>, transform_indices = @transform_5, window_bounds = array<i64: 1, 32>}, {transform_indices = @transform_6, window_bounds = array<i64: 16, 32>}]} {
    %c0 = arith.constant 0 : index
    %c0_0 = arith.constant 0 : index
    %0 = vector.load %arg1[%c0, %c0_0] : memref<16x4xf32, #tpu.memory_space<vmem>>, vector<16x4xf32>
    %c0_1 = arith.constant 0 : index
    %c0_2 = arith.constant 0 : index
    %1 = vector.load %arg3[%c0_1, %c0_2] : memref<4x32xf32, #tpu.memory_space<vmem>>, vector<4x32xf32>
    %cst = arith.constant dense<0.000000e+00> : vector<16x32xf32>
    %2 = tpu.matmul %0, %1, %cst {dimension_numbers = #tpu.dot_dimension_numbers<[1], [0], [0], [1], [0, 0, 1, 1], [], []>} : vector<16x4xf32>, vector<4x32xf32>, vector<16x32xf32> -> vector<16x32xf32>
    %c0_3 = arith.constant 0 : index
    %c0_4 = arith.constant 0 : index
    %3 = vector.load %arg2[%c0_3, %c0_4] : memref<16x1xi32, #tpu.memory_space<vmem>>, vector<16x1xi32>
    %4 = tpu.iota {dimensions = array<i32: 1>} : vector<16x2xi32>
    %5 = vector.broadcast %3 : vector<16x1xi32> to vector<16x2xi32>
    %6 = arith.cmpi eq, %5, %4 : vector<16x2xi32>
    %7 = arith.extui %6 : vector<16x2xi1> to vector<16x2xi32>
    %8 = arith.sitofp %7 : vector<16x2xi32> to vector<16x2xf32>
    %c0_5 = arith.constant 0 : index
    %c0_6 = arith.constant 0 : index
    %9 = vector.load %arg4[%c0_5, %c0_6] : memref<2x32xf32, #tpu.memory_space<vmem>>, vector<2x32xf32>
    %cst_7 = arith.constant dense<0.000000e+00> : vector<16x32xf32>
    %10 = tpu.matmul %8, %9, %cst_7 {dimension_numbers = #tpu.dot_dimension_numbers<[1], [0], [0], [1], [0, 0, 1, 1], [], []>} : vector<16x2xf32>, vector<2x32xf32>, vector<16x32xf32> -> vector<16x32xf32>
    %11 = arith.addf %2, %10 : vector<16x32xf32>
    %cst_8 = arith.constant 0.000000e+00 : f32
    %12 = vector.broadcast %cst_8 : f32 to vector<16x32xf32>
    %13 = arith.maximumf %11, %12 : vector<16x32xf32>
    %c0_9 = arith.constant 0 : index
    %c0_10 = arith.constant 0 : index
    %14 = vector.load %arg5[%c0_9, %c0_10] : memref<32x32xf32, #tpu.memory_space<vmem>>, vector<32x32xf32>
    %cst_11 = arith.constant dense<0.000000e+00> : vector<16x32xf32>
    %15 = tpu.matmul %13, %14, %cst_11 {dimension_numbers = #tpu.dot_dimension_numbers<[1], [0], [0], [1], [0, 0, 1, 1], [], []>} : vector<16x32xf32>, vector<32x32xf32>, vector<16x32xf32> -> vector<16x32xf32>
    %c0_12 = arith.constant 0 : index
    %c0_13 = arith.constant 0 : index
    %16 = vector.load %arg6[%c0_12, %c0_13] : memref<1x32xf32, #tpu.memory_space<vmem>>, vector<1x32xf32>
    %17 = vector.broadcast %16 : vector<1x32xf32> to vector<16x32xf32>
    %18 = arith.addf %15, %17 : vector<16x32xf32>
    %c0_14 = arith.constant 0 : index
    %c0_15 = arith.constant 0 : index
    %19 = vector.load %arg7[%c0_14, %c0_15] : memref<16x32xf32, #tpu.memory_space<vmem>>, vector<16x32xf32>
    tpu.vector_store %arg7[%c0_14, %c0_15], %18 {strides = array<i32>} : memref<16x32xf32, #tpu.memory_space<vmem>>, vector<16x32xf32>,
    return
  }
  func.func @transform_0(%arg0: i32) -> (i32, i32) {
    %c0_i32 = arith.constant 0 : i32
    %c0_i32_0 = arith.constant 0 : i32
    return %arg0, %c0_i32 : i32, i32
  }
  func.func @transform_1(%arg0: i32) -> (i32, i32) {
    %c0_i32 = arith.constant 0 : i32
    %c0_i32_0 = arith.constant 0 : i32
    return %arg0, %c0_i32 : i32, i32
  }
  func.func @transform_2(%arg0: i32) -> (i32, i32) {
    %c0_i32 = arith.constant 0 : i32
    %c0_i32_0 = arith.constant 0 : i32
    %c0_i32_1 = arith.constant 0 : i32
    return %c0_i32, %c0_i32_0 : i32, i32
  }
  func.func @transform_3(%arg0: i32) -> (i32, i32) {
    %c0_i32 = arith.constant 0 : i32
    %c0_i32_0 = arith.constant 0 : i32
    %c0_i32_1 = arith.constant 0 : i32
    return %c0_i32, %c0_i32_0 : i32, i32
  }
  func.func @transform_4(%arg0: i32) -> (i32, i32) {
    %c0_i32 = arith.constant 0 : i32
    %c0_i32_0 = arith.constant 0 : i32
    %c0_i32_1 = arith.constant 0 : i32
    return %c0_i32, %c0_i32_0 : i32, i32
  }
  func.func @transform_5(%arg0: i32) -> (i32, i32) {
    %c0_i32 = arith.constant 0 : i32
    %c0_i32_0 = arith.constant 0 : i32
    %c0_i32_1 = arith.constant 0 : i32
    return %c0_i32, %c0_i32_0 : i32, i32
  }
  func.func @transform_6(%arg0: i32) -> (i32, i32) {
    %c0_i32 = arith.constant 0 : i32
    %c0_i32_0 = arith.constant 0 : i32
    return %arg0, %c0_i32 : i32, i32
  }
}

</mosaic_0001>

<llo_original>
// kernel: edge_decoder.1
$region0: #{edge_decoder.1}
  #allocation0 [shape = 'u32[]', space=smem, size = 0x4, offset = 0x4, fixed_abs, tag = 'smem constant byte address 0x4 - core index']
  #allocation1 [shape = 'u32[144,128]{1,0:T(1,128)}', space=vmem, size = 0x12000, scoped, tag = 'internal scratch']
  %s0 = inlined_call_operand.vmem [shape: f32[20,4], index: 0, kind: input, shape index: {}]
  %s1 = inlined_call_operand.vmem [shape: s32[20,1], index: 1, kind: input, shape index: {}]
  %s2 = inlined_call_operand.vmem [shape: f32[4,32], index: 2, kind: input, shape index: {}]
  %s3 = inlined_call_operand.vmem [shape: f32[2,32], index: 3, kind: input, shape index: {}]
  %s4 = inlined_call_operand.vmem [shape: f32[32,32], index: 4, kind: input, shape index: {}]
  %s5 = inlined_call_operand.vmem [shape: f32[1,32], index: 5, kind: input, shape index: {}]
  %s6 = inlined_call_operand.hbm [shape: f32[20,32], index: 6, kind: output, shape index: {}]
  %s7 = sld [smem:[#allocation0]]
  $region57: #{edge_decoder.1} parent=0
    _
  %s9 = ssub.s32 1, %s7
  %s10 = scalar_select 0, %s9, %s7
  $region1: #{edge_decoder.1} parent=0
    #allocation2 [shape = 'u8[16384]{0}', space=vmem, size = 0x4000, scoped, tag = 'output window, operand 0']
    #allocation3 [shape = 's32[2]{0}', space=sflag, size = 0x8, scoped, tag = 'scoped memory for edge_decoder.1']
    %11 = vsyncpa [#allocation3], 0
    %s12 = scalar_lea.sflag [#allocation3], 1
    %13 = vsyncpa %s12, 0
    loop: start=0, step=1, limit=4
    $region2: #{edge_decoder.1} parent=1 // loop_pre_header
      _
    $region3: #{edge_decoder.1} parent=1 // loop_header
      %s15 = sphi 0, %s19
      %p16 = scmp.ge.s32.totalorder %s15, 4
      %s25 = sphi 0, %s27
      %s28 = sphi 0, %s25
      %s29 = sphi 0, %s28
      %s45 = sphi 0, %s29
      %s51 = sphi 0, %s53
      %s54 = sphi 0, %s51
      %s55 = sphi 0, %s54
      %s71 = sphi 0, %s55
      %s75 = sphi 0, %s75
      %s77 = sphi 0, %s75
      %s78 = sphi 0, %s77
      %s92 = sphi 0, %s78
      %s96 = sphi 0, %s96
      %s98 = sphi 0, %s96
      %s99 = sphi 0, %s98
      %s113 = sphi 0, %s99
      %s117 = sphi 0, %s117
      %s119 = sphi 0, %s117
      %s120 = sphi 0, %s119
      %s134 = sphi 0, %s120
      %s138 = sphi 0, %s138
      %s140 = sphi 0, %s138
      %s141 = sphi 0, %s140
      %s155 = sphi 0, %s141
      %s161 = sphi 0, %s163
      %s164 = sphi 0, %s161
      %s165 = sphi 0, %s164
      %s181 = sphi 0, %s165
    $region4: #{edge_decoder.1} parent=1 // loop_header_branch
      %18 = sbr.rel (%p16) target = $region8
    $region5: #{edge_decoder.1} parent=1 // loop_body
      %s20 = ssub.s32 %s15, 1
      %s21 = ssub.s32 %s15, 2
      %s22 = sadd.s32 %s15, 1
      %s23 = ssub.s32 %s15, %s22
      %p24 = scmp.eq.s32.totalorder %s23, 0
      %s26 = sadd.s32 %s25, 1
      %s27 = scalar_select %p24, %s25, %s26
      %p30 = pneg %p24
      %p31 = scmp.eq.s32.totalorder %s15, 1
      %p32 = por %p30, %p31
      %p33 = scmp.ne.s32.totalorder %s25, %s28
      %p34 = scmp.eq.s32.totalorder %s15, 0
      %p35 = por %p33, %p34
      %p36 = scmp.ne.s32.totalorder %s25, %s28
      %p37 = scmp.eq.s32.totalorder %s20, 1
      %p38 = por %p36, %p37
      %p39 = scmp.ne.s32.totalorder %s28, %s29
      %p40 = scmp.eq.s32.totalorder %s20, 0
      %p41 = por %p39, %p40
      %p42 = scmp.ne.s32.totalorder %s28, %s29
      %p43 = scmp.eq.s32.totalorder %s21, 1
      %p44 = por %p42, %p43
      %p46 = scmp.ne.s32.totalorder %s29, %s45
      %p47 = scmp.eq.s32.totalorder %s21, 0
      %p48 = por %p46, %p47
      %s49 = ssub.s32 %s15, %s22
      %p50 = scmp.eq.s32.totalorder %s49, 0
      %s52 = sadd.s32 %s51, 1
      %s53 = scalar_select %p50, %s51, %s52
      %p56 = pneg %p50
      %p57 = scmp.eq.s32.totalorder %s15, 1
      %p58 = por %p56, %p57
      %p59 = scmp.ne.s32.totalorder %s51, %s54
      %p60 = scmp.eq.s32.totalorder %s15, 0
      %p61 = por %p59, %p60
      %p62 = scmp.ne.s32.totalorder %s51, %s54
      %p63 = scmp.eq.s32.totalorder %s20, 1
      %p64 = por %p62, %p63
      %p65 = scmp.ne.s32.totalorder %s54, %s55
      %p66 = scmp.eq.s32.totalorder %s20, 0
      %p67 = por %p65, %p66
      %p68 = scmp.ne.s32.totalorder %s54, %s55
      %p69 = scmp.eq.s32.totalorder %s21, 1
      %p70 = por %p68, %p69
      %p72 = scmp.ne.s32.totalorder %s55, %s71
      %p73 = scmp.eq.s32.totalorder %s21, 0
      %p74 = por %p72, %p73
      %s76 = sadd.s32 %s75, 1
      %p79 = scmp.eq.s32.totalorder %s15, 1
      %p80 = scmp.ne.s32.totalorder %s75, %s77
      %p81 = scmp.eq.s32.totalorder %s15, 0
      %p82 = por %p80, %p81
      %p83 = scmp.ne.s32.totalorder %s75, %s77
      %p84 = scmp.eq.s32.totalorder %s20, 1
      %p85 = por %p83, %p84
      %p86 = scmp.ne.s32.totalorder %s77, %s78
      %p87 = scmp.eq.s32.totalorder %s20, 0
      %p88 = por %p86, %p87
      %p89 = scmp.ne.s32.totalorder %s77, %s78
      %p90 = scmp.eq.s32.totalorder %s21, 1
      %p91 = por %p89, %p90
      %p93 = scmp.ne.s32.totalorder %s78, %s92
      %p94 = scmp.eq.s32.totalorder %s21, 0
      %p95 = por %p93, %p94
      %s97 = sadd.s32 %s96, 1
      %p100 = scmp.eq.s32.totalorder %s15, 1
      %p101 = scmp.ne.s32.totalorder %s96, %s98
      %p102 = scmp.eq.s32.totalorder %s15, 0
      %p103 = por %p101, %p102
      %p104 = scmp.ne.s32.totalorder %s96, %s98
      %p105 = scmp.eq.s32.totalorder %s20, 1
      %p106 = por %p104, %p105
      %p107 = scmp.ne.s32.totalorder %s98, %s99
      %p108 = scmp.eq.s32.totalorder %s20, 0
      %p109 = por %p107, %p108
      %p110 = scmp.ne.s32.totalorder %s98, %s99
      %p111 = scmp.eq.s32.totalorder %s21, 1
      %p112 = por %p110, %p111
      %p114 = scmp.ne.s32.totalorder %s99, %s113
      %p115 = scmp.eq.s32.totalorder %s21, 0
      %p116 = por %p114, %p115
      %s118 = sadd.s32 %s117, 1
      %p121 = scmp.eq.s32.totalorder %s15, 1
      %p122 = scmp.ne.s32.totalorder %s117, %s119
      %p123 = scmp.eq.s32.totalorder %s15, 0
      %p124 = por %p122, %p123
      %p125 = scmp.ne.s32.totalorder %s117, %s119
      %p126 = scmp.eq.s32.totalorder %s20, 1
      %p127 = por %p125, %p126
      %p128 = scmp.ne.s32.totalorder %s119, %s120
      %p129 = scmp.eq.s32.totalorder %s20, 0
      %p130 = por %p128, %p129
      %p131 = scmp.ne.s32.totalorder %s119, %s120
      %p132 = scmp.eq.s32.totalorder %s21, 1
      %p133 = por %p131, %p132
      %p135 = scmp.ne.s32.totalorder %s120, %s134
      %p136 = scmp.eq.s32.totalorder %s21, 0
      %p137 = por %p135, %p136
      %s139 = sadd.s32 %s138, 1
      %p142 = scmp.eq.s32.totalorder %s15, 1
      %p143 = scmp.ne.s32.totalorder %s138, %s140
      %p144 = scmp.eq.s32.totalorder %s15, 0
      %p145 = por %p143, %p144
      %p146 = scmp.ne.s32.totalorder %s138, %s140
      %p147 = scmp.eq.s32.totalorder %s20, 1
      %p148 = por %p146, %p147
      %p149 = scmp.ne.s32.totalorder %s140, %s141
      %p150 = scmp.eq.s32.totalorder %s20, 0
      %p151 = por %p149, %p150
      %p152 = scmp.ne.s32.totalorder %s140, %s141
      %p153 = scmp.eq.s32.totalorder %s21, 1
      %p154 = por %p152, %p153
      %p156 = scmp.ne.s32.totalorder %s141, %s155
      %p157 = scmp.eq.s32.totalorder %s21, 0
      %p158 = por %p156, %p157
      %s159 = ssub.s32 %s15, %s22
      %p160 = scmp.eq.s32.totalorder %s159, 0
      %s162 = sadd.s32 %s161, 1
      %s163 = scalar_select %p160, %s161, %s162
      %p166 = pneg %p160
      %p167 = scmp.eq.s32.totalorder %s15, 1
      %p168 = por %p166, %p167
      %p169 = scmp.ne.s32.totalorder %s161, %s164
      %p170 = scmp.eq.s32.totalorder %s15, 0
      %p171 = por %p169, %p170
      %p172 = scmp.ne.s32.totalorder %s161, %s164
      %p173 = scmp.eq.s32.totalorder %s20, 1
      %p174 = por %p172, %p173
      %p175 = scmp.ne.s32.totalorder %s164, %s165
      %p176 = scmp.eq.s32.totalorder %s20, 0
      %p177 = por %p175, %p176
      %p178 = scmp.ne.s32.totalorder %s164, %s165
      %p179 = scmp.eq.s32.totalorder %s21, 1
      %p180 = por %p178, %p179
      %p182 = scmp.ne.s32.totalorder %s165, %s181
      %p183 = scmp.eq.s32.totalorder %s21, 0
      %p184 = por %p182, %p183
      %p185 = scmp.le.s32.totalorder 1, %s15
      %p186 = scmp.lt.s32.totalorder %s15, 3
      %p187 = pnand %p185, %p186
      %p188 = pneg %p187
      // Predicated region
      $region9: #{edge_decoder.1} parent=5 // pred_check
        _
      $region10: #{edge_decoder.1} parent=5 // pred_check_branch
        %190 = sbr.rel (%p187) target = $region12
      $region11: #{edge_decoder.1} parent=5 // pred_region
        %s191 = ssub.s32 %s15, 1
        // Predicated region
        $region13: #{edge_decoder.1} parent=11 // pred_check
          %p192 = pneg %p88
        $region14: #{edge_decoder.1} parent=11 // pred_check_branch
          %194 = sbr.rel (%p192) target = $region16
        $region15: #{edge_decoder.1} parent=11 // pred_region
          _
        $region16: #{edge_decoder.1} parent=11 // pred_fallthru
          _
        // Predicated region
        $region17: #{edge_decoder.1} parent=11 // pred_check
          %p195 = pneg %p109
        $region18: #{edge_decoder.1} parent=11 // pred_check_branch
          %197 = sbr.rel (%p195) target = $region20
        $region19: #{edge_decoder.1} parent=11 // pred_region
          _
        $region20: #{edge_decoder.1} parent=11 // pred_fallthru
          _
        // Predicated region
        $region21: #{edge_decoder.1} parent=11 // pred_check
          %p198 = pneg %p130
        $region22: #{edge_decoder.1} parent=11 // pred_check_branch
          %200 = sbr.rel (%p198) target = $region24
        $region23: #{edge_decoder.1} parent=11 // pred_region
          _
        $region24: #{edge_decoder.1} parent=11 // pred_fallthru
          _
        // Predicated region
        $region25: #{edge_decoder.1} parent=11 // pred_check
          %p201 = pneg %p151
        $region26: #{edge_decoder.1} parent=11 // pred_check_branch
          %203 = sbr.rel (%p201) target = $region28
        $region27: #{edge_decoder.1} parent=11 // pred_region
          _
        $region28: #{edge_decoder.1} parent=11 // pred_fallthru
          _
      $region12: #{edge_decoder.1} parent=5 // pred_fallthru
        _
      %p204 = scmp.lt.s32.totalorder %s15, 2
      // Predicated region
      $region29: #{edge_decoder.1} parent=5 // pred_check
        %p205 = pneg %p204
      $region30: #{edge_decoder.1} parent=5 // pred_check_branch
        %207 = sbr.rel (%p205) target = $region32
      $region31: #{edge_decoder.1} parent=5 // pred_region
        // Predicated region
        $region33: #{edge_decoder.1} parent=31 // pred_check
          %p208 = pneg %p35
        $region34: #{edge_decoder.1} parent=31 // pred_check_branch
          %210 = sbr.rel (%p208) target = $region36
        $region35: #{edge_decoder.1} parent=31 // pred_region
          %s211 = smul.u32 2, %s15
          %s212 = ssub.s32 3, %s211
          %p213 = scmp.lt.s32.totalorder %s212, 2
          %s214 = scalar_select %p213, %s212, 2
          %s215 = smul.u32 128, %s214
          %p216 = scmp.lt.s32.totalorder %s211, 2
          %s217 = scalar_select %p216, %s211, 2
          %s218 = smul.addr %s217, 8
          %s219 = scalar_lea.vmem %s0, %s218
          %s220 = smul.u32 2, %s15
          %s221 = ssub.s32 3, %s220
          %p222 = scmp.lt.s32.totalorder %s221, 2
          %s223 = scalar_select %p222, %s221, 2
          %s224 = smul.u32 128, %s223
        $region36: #{edge_decoder.1} parent=31 // pred_fallthru
          _
        // Predicated region
        $region37: #{edge_decoder.1} parent=31 // pred_check
          %p225 = pneg %p61
        $region38: #{edge_decoder.1} parent=31 // pred_check_branch
          %227 = sbr.rel (%p225) target = $region40
        $region39: #{edge_decoder.1} parent=31 // pred_region
          %s228 = smul.u32 2, %s15
          %s229 = ssub.s32 3, %s228
          %p230 = scmp.lt.s32.totalorder %s229, 2
          %s231 = scalar_select %p230, %s229, 2
          %s232 = smul.u32 128, %s231
          %p233 = scmp.lt.s32.totalorder %s228, 2
          %s234 = scalar_select %p233, %s228, 2
          %s235 = smul.addr %s234, 8
          %s236 = scalar_lea.vmem %s1, %s235
          %s237 = smul.u32 2, %s15
          %s238 = ssub.s32 3, %s237
          %p239 = scmp.lt.s32.totalorder %s238, 2
          %s240 = scalar_select %p239, %s238, 2
          %s241 = smul.u32 128, %s240
        $region40: #{edge_decoder.1} parent=31 // pred_fallthru
          _
      $region32: #{edge_decoder.1} parent=5 // pred_fallthru
        _
      %p242 = scmp.le.s32.totalorder 1, %s15
      %p243 = scmp.lt.s32.totalorder %s15, 3
      %p244 = pnand %p242, %p243
      %p245 = pneg %p244
      // Predicated region
      $region41: #{edge_decoder.1} parent=5 // pred_check
        _
      $region42: #{edge_decoder.1} parent=5 // pred_check_branch
        %247 = sbr.rel (%p244) target = $region44
      $region43: #{edge_decoder.1} parent=5 // pred_region
        %s248 = ssub.s32 %s15, 1
        %s249 = smul.u32 2, %s20
        %s250 = ssub.s32 3, %s249
        %p251 = scmp.lt.s32.totalorder %s250, 2
        %s252 = scalar_select %p251, %s250, 2
        %s253 = smul.u32 128, %s252
        %p254 = scmp.lt.s32.totalorder %s249, 2
        %s255 = scalar_select %p254, %s249, 2
        %s256 = smul.addr %s255, 8
        %s257 = scalar_lea.vmem %s0, %s256
        %p258 = pneg %p41
        %p259 = pneg %p38
        %s260 = smul.u32 2, %s20
        %s261 = ssub.s32 3, %s260
        %p262 = scmp.lt.s32.totalorder %s261, 2
        %s263 = scalar_select %p262, %s261, 2
        %s264 = smul.u32 128, %s263
        %p265 = scmp.lt.s32.totalorder %s260, 2
        %s266 = scalar_select %p265, %s260, 2
        %s267 = smul.addr %s266, 8
        %s268 = scalar_lea.vmem %s1, %s267
        %p269 = pneg %p67
        %p270 = pneg %p64
        %p271 = pneg %p88
        %p272 = pneg %p85
        %p273 = pneg %p109
        %p274 = pneg %p106
        %p275 = pneg %p130
        %p276 = pneg %p127
        %p277 = pneg %p151
        %p278 = pneg %p148
        %p279 = pneg %p177
        %p280 = pneg %p174
        %s281 = sand.u32 %s164, 1
        %s282 = scalar_lea.sflag [#allocation3], %s281
        %s283 = sand.u32 %s164, 1
        %s284 = smul.addr %s283, 16
        %s285 = scalar_lea.vmem [#allocation2], %s284
        %s286 = smul.u32 2, %s20
        %s287 = ssub.s32 3, %s286
        %p288 = scmp.lt.s32.totalorder %s287, 2
        %s289 = scalar_select %p288, %s287, 2
        %s290 = smul.u32 128, %s289
        %p291 = scmp.lt.s32.totalorder %s286, 2
        %s292 = scalar_select %p291, %s286, 2
        %s293 = smul.addr %s292, 8
        %s294 = scalar_lea.vmem %s0, %s293
        %s295 = smul.u32 2, %s20
        %s296 = ssub.s32 3, %s295
        %p297 = scmp.lt.s32.totalorder %s296, 2
        %s298 = scalar_select %p297, %s296, 2
        %s299 = smul.u32 128, %s298
        %s300 = smul.u32 2, %s20
        %s301 = ssub.s32 3, %s300
        %p302 = scmp.lt.s32.totalorder %s301, 2
        %s303 = scalar_select %p302, %s301, 2
        %s304 = smul.u32 128, %s303
        %p305 = scmp.lt.s32.totalorder %s300, 2
        %s306 = scalar_select %p305, %s300, 2
        %s307 = smul.addr %s306, 8
        %s308 = scalar_lea.vmem %s1, %s307
        %s309 = smul.u32 2, %s20
        %s310 = ssub.s32 3, %s309
        %p311 = scmp.lt.s32.totalorder %s310, 2
        %s312 = scalar_select %p311, %s310, 2
        %s313 = smul.u32 128, %s312
        %s314 = smul.u32 2, %s20
        %s315 = ssub.s32 3, %s314
        %p316 = scmp.lt.s32.totalorder %s315, 2
        %s317 = scalar_select %p316, %s315, 2
        %s318 = smul.u32 128, %s317
        %v319 = vld [vmem:[%s294] sm:$0xff]
        %v320 = vld [vmem:[%s294 + $0x8] sm:$0xff]
        %v321 = vld [vmem:[%s2] sm:$0xf]
        %v322 = vld [vmem:[%s308] sm:$0xff]
        %v323 = vld [vmem:[%s308 + $0x8] sm:$0xff]
        %v324 = vlaneseq
        %v325 = vand.u32 %v324, 127
        %326 = vset.pattern.permute.xlu0 0
        %327 = vperm.xlu0 %326, %v322
        %v328 = vpop.permute.xlu0 %327
        %329 = vset.pattern.permute.xlu0 0
        %330 = vperm.xlu0 %329, %v323
        %v331 = vpop.permute.xlu0 %330
        %vm332 = vcmp.eq.s32.totalorder %v328, %v325
        %vm333 = vcmp.eq.s32.totalorder %v331, %v325
        %v334 = vsel %vm332, 1, 0
        %v335 = vsel %vm333, 1, 0
        %v336 = vcvt.s32.f32 %v334
        %v337 = vcvt.s32.f32 %v335
        %v338 = vld [vmem:[%s3] sm:$0x3]
        %vm339 = vcmask 15360
        %v341 = vsel %vm339, %v336, 0
        %v344 = vsel %vm339, %v337, 0
        %vm346 = vcmask 1041408
        %v348 = vsel %vm346, %v338, 0
        %350 = vmatprep.subr.mxu0 0.0
        %351 = vmatpush1.msra.mxu0 %v348
        %352 = vmatprep.subr.mxu0 0.0
        %353 = vmatpush1.msra.mxu0 0.0
        %354 = vmatprep.subr.mxu0 0.0
        %355 = vmatpush1.msra.mxu0 0.0
        %356 = vmatprep.subr.mxu0 0.0
        %357 = vmatpush1.msra.mxu0 0.0
        %358 = vmatprep.subr.mxu0 0.0
        %359 = vmatpush1.msra.mxu0 0.0
        %360 = vmatprep.subr.mxu0 0.0
        %361 = vmatpush1.msra.mxu0 0.0
        %362 = vmatprep.subr.mxu0 0.0
        %363 = vmatpush1.msra.mxu0 0.0
        %364 = vmatprep.subr.mxu0 0.0
        %365 = vmatpush1.msra.mxu0 0.0
        %366 = vmatprep.subr.mxu0 0.0
        %367 = vmatpush1.msra.mxu0 0.0
        %368 = vmatprep.subr.mxu0 0.0
        %369 = vmatpush1.msra.mxu0 0.0
        %370 = vmatprep.subr.mxu0 0.0
        %371 = vmatpush1.msra.mxu0 0.0
        %372 = vmatprep.subr.mxu0 0.0
        %373 = vmatpush1.msra.mxu0 0.0
        %374 = vmatprep.subr.mxu0 0.0
        %375 = vmatpush1.msra.mxu0 0.0
        %376 = vmatprep.subr.mxu0 0.0
        %377 = vmatpush1.msra.mxu0 0.0
        %378 = vmatprep.subr.mxu0 0.0
        %379 = vmatpush1.msra.mxu0 0.0
        %380 = vmatprep.subr.mxu0 0.0
        %381 = vmatpush1.msra.mxu0 0.0
        %382 = vmatprep.subr.mxu0 0.0
        %383 = vmatpush1.msra.mxu0 0.0
        %384 = vmatprep.subr.mxu0 0.0
        %385 = vmatpush1.msra.mxu0 0.0
        %386 = vmatprep.subr.mxu0 0.0
        %387 = vmatpush1.msra.mxu0 0.0
        %388 = vmatprep.subr.mxu0 0.0
        %389 = vmatpush1.msra.mxu0 0.0
        %390 = vmatprep.subr.mxu0 0.0
        %391 = vmatpush1.msra.mxu0 0.0
        %392 = vmatprep.subr.mxu0 0.0
        %393 = vmatpush1.msra.mxu0 0.0
        %394 = vmatprep.subr.mxu0 0.0
        %395 = vmatpush1.msra.mxu0 0.0
        %396 = vmatprep.subr.mxu0 0.0
        %397 = vmatpush1.msra.mxu0 0.0
        %398 = vmatprep.subr.mxu0 0.0
        %399 = vmatpush1.msra.mxu0 0.0
        %400 = vmatprep.subr.mxu0 0.0
        %401 = vmatpush1.msra.mxu0 0.0
        %402 = vmatprep.subr.mxu0 0.0
        %403 = vmatpush1.msra.mxu0 0.0
        %404 = vmatprep.subr.mxu0 0.0
        %405 = vmatpush1.msra.mxu0 0.0
        %406 = vmatprep.subr.mxu0 0.0
        %407 = vmatpush1.msra.mxu0 0.0
        %408 = vmatprep.subr.mxu0 0.0
        %409 = vmatpush1.msra.mxu0 0.0
        %410 = vmatprep.subr.mxu0 0.0
        %411 = vmatpush1.msra.mxu0 0.0
        %412 = vmatprep.subr.mxu0 0.0
        %413 = vmatpush1.msra.mxu0 0.0
        %414 = vmatprep.mubr.f32.mxu0 0.0
        %415 = vmatmul.mubr.f32.gmra.mrb[0].mxu0 %v341
        %v416 = vpop.f32.mrb[0].mxu0
        %v417 = vadd.f32 0.0, %v416
        %v418 = vpop.f32.mrb[0].mxu0
        %419 = vmatprep.mubr.f32.mxu0 0.0
        %420 = vmatmul.mubr.f32.gmra.mrb[0].mxu0 %v344
        %v421 = vpop.f32.mrb[0].mxu0
        %v422 = vadd.f32 0.0, %v421
        %v423 = vpop.f32.mrb[0].mxu0
        %424 = vdwg.mxu0
        %vm425 = vcmask 31744
        %v427 = vsel %vm425, %v319, 0
        %v430 = vsel %vm425, %v320, 0
        %vm432 = vcmask 1043456
        %v434 = vsel %vm432, %v321, 0
        %436 = vmatprep.subr.mxu0 0.0
        %437 = vmatpush1.msra.mxu0 %v434
        %438 = vmatprep.subr.mxu0 0.0
        %439 = vmatpush1.msra.mxu0 0.0
        %440 = vmatprep.subr.mxu0 0.0
        %441 = vmatpush1.msra.mxu0 0.0
        %442 = vmatprep.subr.mxu0 0.0
        %443 = vmatpush1.msra.mxu0 0.0
        %444 = vmatprep.subr.mxu0 0.0
        %445 = vmatpush1.msra.mxu0 0.0
        %446 = vmatprep.subr.mxu0 0.0
        %447 = vmatpush1.msra.mxu0 0.0
        %448 = vmatprep.subr.mxu0 0.0
        %449 = vmatpush1.msra.mxu0 0.0
        %450 = vmatprep.subr.mxu0 0.0
        %451 = vmatpush1.msra.mxu0 0.0
        %452 = vmatprep.subr.mxu0 0.0
        %453 = vmatpush1.msra.mxu0 0.0
        %454 = vmatprep.subr.mxu0 0.0
        %455 = vmatpush1.msra.mxu0 0.0
        %456 = vmatprep.subr.mxu0 0.0
        %457 = vmatpush1.msra.mxu0 0.0
        %458 = vmatprep.subr.mxu0 0.0
        %459 = vmatpush1.msra.mxu0 0.0
        %460 = vmatprep.subr.mxu0 0.0
        %461 = vmatpush1.msra.mxu0 0.0
        %462 = vmatprep.subr.mxu0 0.0
        %463 = vmatpush1.msra.mxu0 0.0
        %464 = vmatprep.subr.mxu0 0.0
        %465 = vmatpush1.msra.mxu0 0.0
        %466 = vmatprep.subr.mxu0 0.0
        %467 = vmatpush1.msra.mxu0 0.0
        %468 = vmatprep.subr.mxu0 0.0
        %469 = vmatpush1.msra.mxu0 0.0
        %470 = vmatprep.subr.mxu0 0.0
        %471 = vmatpush1.msra.mxu0 0.0
        %472 = vmatprep.subr.mxu0 0.0
        %473 = vmatpush1.msra.mxu0 0.0
        %474 = vmatprep.subr.mxu0 0.0
        %475 = vmatpush1.msra.mxu0 0.0
        %476 = vmatprep.subr.mxu0 0.0
        %477 = vmatpush1.msra.mxu0 0.0
        %478 = vmatprep.subr.mxu0 0.0
        %479 = vmatpush1.msra.mxu0 0.0
        %480 = vmatprep.subr.mxu0 0.0
        %481 = vmatpush1.msra.mxu0 0.0
        %482 = vmatprep.subr.mxu0 0.0
        %483 = vmatpush1.msra.mxu0 0.0
        %484 = vmatprep.subr.mxu0 0.0
        %485 = vmatpush1.msra.mxu0 0.0
        %486 = vmatprep.subr.mxu0 0.0
        %487 = vmatpush1.msra.mxu0 0.0
        %488 = vmatprep.subr.mxu0 0.0
        %489 = vmatpush1.msra.mxu0 0.0
        %490 = vmatprep.subr.mxu0 0.0
        %491 = vmatpush1.msra.mxu0 0.0
        %492 = vmatprep.subr.mxu0 0.0
        %493 = vmatpush1.msra.mxu0 0.0
        %494 = vmatprep.subr.mxu0 0.0
        %495 = vmatpush1.msra.mxu0 0.0
        %496 = vmatprep.subr.mxu0 0.0
        %497 = vmatpush1.msra.mxu0 0.0
        %498 = vmatprep.subr.mxu0 0.0
        %499 = vmatpush1.msra.mxu0 0.0
        %500 = vmatprep.mubr.f32.mxu0 0.0
        %501 = vmatmul.mubr.f32.gmra.mrb[0].mxu0 %v427
        %v502 = vpop.f32.mrb[0].mxu0
        %v503 = vadd.f32 %v417, %v502
        %v504 = vpop.f32.mrb[0].mxu0
        %505 = vmatprep.mubr.f32.mxu0 0.0
        %506 = vmatmul.mubr.f32.gmra.mrb[0].mxu0 %v430
        %v507 = vpop.f32.mrb[0].mxu0
        %v508 = vadd.f32 %v422, %v507
        %v509 = vpop.f32.mrb[0].mxu0
        %510 = vdwg.mxu0
        %v511 = vmax.f32 %v503, 0.0
        %v512 = vmax.f32 %v508, 0.0
        %v513 = vld [vmem:[%s4] sm:$0xff]
        %v514 = vld [vmem:[%s4 + $0x8] sm:$0xff]
        %v515 = vld [vmem:[%s4 + $0x10] sm:$0xff]
        %v516 = vld [vmem:[%s4 + $0x18] sm:$0xff]
        %v517 = vld [vmem:[%s5] sm:$0x1]
        %v519 = vlaneseq
        %v520 = vshrl.u32 %v519, 7
        %v521 = vsub.s32 0, %v520
        %v522 = vrot.slane %v517, %v521
        %vm524 = vcmask 261120
        %v526 = vsel %vm524, %v511, 0
        %v529 = vsel %vm524, %v512, 0
        %531 = vmatprep.subr.mxu0 0.0
        %532 = vmatpush1.msra.mxu0 %v513
        %533 = vmatprep.subr.mxu0 0.0
        %534 = vmatpush1.msra.mxu0 %v514
        %535 = vmatprep.subr.mxu0 0.0
        %536 = vmatpush1.msra.mxu0 %v515
        %537 = vmatprep.subr.mxu0 0.0
        %538 = vmatpush1.msra.mxu0 %v516
        %539 = vmatprep.subr.mxu0 0.0
        %540 = vmatpush1.msra.mxu0 0.0
        %541 = vmatprep.subr.mxu0 0.0
        %542 = vmatpush1.msra.mxu0 0.0
        %543 = vmatprep.subr.mxu0 0.0
        %544 = vmatpush1.msra.mxu0 0.0
        %545 = vmatprep.subr.mxu0 0.0
        %546 = vmatpush1.msra.mxu0 0.0
        %547 = vmatprep.subr.mxu0 0.0
        %548 = vmatpush1.msra.mxu0 0.0
        %549 = vmatprep.subr.mxu0 0.0
        %550 = vmatpush1.msra.mxu0 0.0
        %551 = vmatprep.subr.mxu0 0.0
        %552 = vmatpush1.msra.mxu0 0.0
        %553 = vmatprep.subr.mxu0 0.0
        %554 = vmatpush1.msra.mxu0 0.0
        %555 = vmatprep.subr.mxu0 0.0
        %556 = vmatpush1.msra.mxu0 0.0
        %557 = vmatprep.subr.mxu0 0.0
        %558 = vmatpush1.msra.mxu0 0.0
        %559 = vmatprep.subr.mxu0 0.0
        %560 = vmatpush1.msra.mxu0 0.0
        %561 = vmatprep.subr.mxu0 0.0
        %562 = vmatpush1.msra.mxu0 0.0
        %563 = vmatprep.subr.mxu0 0.0
        %564 = vmatpush1.msra.mxu0 0.0
        %565 = vmatprep.subr.mxu0 0.0
        %566 = vmatpush1.msra.mxu0 0.0
        %567 = vmatprep.subr.mxu0 0.0
        %568 = vmatpush1.msra.mxu0 0.0
        %569 = vmatprep.subr.mxu0 0.0
        %570 = vmatpush1.msra.mxu0 0.0
        %571 = vmatprep.subr.mxu0 0.0
        %572 = vmatpush1.msra.mxu0 0.0
        %573 = vmatprep.subr.mxu0 0.0
        %574 = vmatpush1.msra.mxu0 0.0
        %575 = vmatprep.subr.mxu0 0.0
        %576 = vmatpush1.msra.mxu0 0.0
        %577 = vmatprep.subr.mxu0 0.0
        %578 = vmatpush1.msra.mxu0 0.0
        %579 = vmatprep.subr.mxu0 0.0
        %580 = vmatpush1.msra.mxu0 0.0
        %581 = vmatprep.subr.mxu0 0.0
        %582 = vmatpush1.msra.mxu0 0.0
        %583 = vmatprep.subr.mxu0 0.0
        %584 = vmatpush1.msra.mxu0 0.0
        %585 = vmatprep.subr.mxu0 0.0
        %586 = vmatpush1.msra.mxu0 0.0
        %587 = vmatprep.subr.mxu0 0.0
        %588 = vmatpush1.msra.mxu0 0.0
        %589 = vmatprep.subr.mxu0 0.0
        %590 = vmatpush1.msra.mxu0 0.0
        %591 = vmatprep.subr.mxu0 0.0
        %592 = vmatpush1.msra.mxu0 0.0
        %593 = vmatprep.subr.mxu0 0.0
        %594 = vmatpush1.msra.mxu0 0.0
        %595 = vmatprep.mubr.f32.mxu0 0.0
        %596 = vmatmul.mubr.f32.gmra.mrb[0].mxu0 %v526
        %v597 = vpop.f32.mrb[0].mxu0
        %v598 = vadd.f32 %v522, %v597
        %v599 = vpop.f32.mrb[0].mxu0
        %600 = vmatprep.mubr.f32.mxu0 0.0
        %601 = vmatmul.mubr.f32.gmra.mrb[0].mxu0 %v529
        %v602 = vpop.f32.mrb[0].mxu0
        %v603 = vadd.f32 %v522, %v602
        %v604 = vpop.f32.mrb[0].mxu0
        %605 = vdwg.mxu0
        %606 = vst.msk [vmem:[%s285] sm:$0xff] %vm524, %v598
        %607 = vst.msk [vmem:[%s285 + $0x8] sm:$0xff] %vm524, %v603
        %s608 = sand.u32 %s164, 1
        %s609 = scalar_lea.sflag [#allocation3], %s608
        %s610 = sand.u32 %s164, 1
        %s611 = smul.addr %s610, 16
        %s612 = scalar_lea.vmem [#allocation2], %s611
        // Predicated region
        $region45: #{edge_decoder.1} parent=43 // pred_check
          %p613 = pneg %p174
        $region46: #{edge_decoder.1} parent=43 // pred_check_branch
          %615 = sbr.rel (%p613) target = $region48
        $region47: #{edge_decoder.1} parent=43 // pred_region
          %s616 = smul.u32 2, %s20
          %s617 = ssub.s32 3, %s616
          %p618 = scmp.lt.s32.totalorder %s617, 2
          %s619 = scalar_select %p618, %s617, 2
          %s620 = smul.u32 128, %s619
          %s622 = ssub.s32 256, %s620
          %623 = vsyncadd %s609, %s622
          %p624 = scmp.ne.s32.totalorder 0, %s620
          %s625 = smul.addr %s616, 128
          %s626 = scalar_lea.hbm %s6, %s625
          %s627 = smul.u32 8, %s619
          %s628 = sshll.u32 %s612, 4
          %s629 = int_to_ptr.vmem [resolvable:$true] %s628
          %s630 = sshll.u32 %s627, 4
          %634 = dma.vmem_to_hbm [thread:$0]  (%p624), %s629, %s630, %s626, %s609, 128, 128, 8
        $region48: #{edge_decoder.1} parent=43 // pred_fallthru
          _
      $region44: #{edge_decoder.1} parent=5 // pred_fallthru
        _
      %p635 = scmp.le.s32.totalorder 2, %s15
      // Predicated region
      $region49: #{edge_decoder.1} parent=5 // pred_check
        %p636 = pneg %p635
      $region50: #{edge_decoder.1} parent=5 // pred_check_branch
        %638 = sbr.rel (%p636) target = $region52
      $region51: #{edge_decoder.1} parent=5 // pred_region
        %s639 = ssub.s32 %s15, 2
        // Predicated region
        $region53: #{edge_decoder.1} parent=51 // pred_check
          %p640 = pneg %p180
        $region54: #{edge_decoder.1} parent=51 // pred_check_branch
          %642 = sbr.rel (%p640) target = $region56
        $region55: #{edge_decoder.1} parent=51 // pred_region
          %s643 = sand.u32 %s165, 1
          %s644 = scalar_lea.sflag [#allocation3], %s643
          %s645 = sand.u32 %s165, 1
          %s646 = smul.addr %s645, 16
          %s647 = scalar_lea.vmem [#allocation2], %s646
          %648 = dma.done %s644, 256
        $region56: #{edge_decoder.1} parent=51 // pred_fallthru
          _
      $region52: #{edge_decoder.1} parent=5 // pred_fallthru
        _
    $region6: #{edge_decoder.1} parent=1 // loop_footer
      %s19 = sadd.s32 1, %s15
    $region7: #{edge_decoder.1} parent=1 // loop_footer_branch
      %14 = sbr.rel target = $region3
    $region8: #{edge_decoder.1} parent=1 // loop_exit
      _
    %649 = vsyncpa [#allocation3], 1
    %s650 = scalar_lea.sflag [#allocation3], 1
    %651 = vsyncpa %s650, 1

</llo_original>
